<compile_context>
chip_gen: v6e
topology: v6e:2x2x1
jax: 0.10.0
libtpu: 0.0.40
codegen_flags: <defaults>
</compile_context>

<pallas_src>
import jax
import jax.numpy as jnp
from jax.experimental import pallas as pl
from jax.experimental.pallas import tpu as pltpu


# Fixed binary "kernel trick" mask from the module __init__, shape (16, 4).
KERNEL_CONST = jnp.array(
    [[1, 1, 1, 1], [0, 0, 0, 1], [0, 0, 1, 0], [0, 1, 0, 0],
     [1, 0, 0, 0], [0, 0, 1, 1], [0, 1, 0, 1], [0, 1, 1, 0],
     [1, 0, 0, 1], [1, 0, 1, 0], [1, 1, 0, 0], [0, 1, 1, 1],
     [1, 0, 1, 1], [1, 1, 0, 1], [1, 1, 1, 0], [1, 1, 1, 1]],
    dtype=jnp.float32)


def build_weight(param_diff, param_same):
    """Reproduce the weight construction of kernel_trick.forward().

    param_diff: (16, 1, 4), param_same: (16, 15, 1).
    Returns OIHW conv weight of shape (16, 16, 2, 2).
    """
    kernel = jnp.broadcast_to(KERNEL_CONST[None, :, :], (16, 16, 4))
    param = jnp.concatenate(
        [param_diff, jnp.broadcast_to(param_same, (16, 15, 4))], axis=1)
    w = kernel * param                      # (16, 16, 4), tap index t = 2*kh + kw
    return w.reshape(16, 16, 2, 2)          # (out, in, kh, kw)


def _round_up(v, m):
    return (v + m - 1) // m * m


def _pick_group_size(B):
    """Batches packed per grid step.

    Keep >= 2 grid steps when B >= 2 so both v7x TensorCores get work
    ("parallel" grid axis); for larger B pack batches along lanes to amortize
    per-step and per-matmul fixed overhead."""
    if B <= 2:
        return 1
    for g in range(B // 2, 0, -1):          # largest divisor keeping >= 2 groups
        if B % g == 0:
            return g
    return 1


def _fused_conv_pallas(x_flat, w_stk, *, H, W, p, out_dtype):
    """Fused pad + stack + K=64 MXU matmul.

    x_flat: (B, C, H*W)  raw NCHW image rows (free reshape of the input).
    w_stk : (CO, 4*C)    stacked weights, column index = 16*(2*kh+kw) + ci.
    Returns (B, CO, n_pix) in exact NCHW flat order, n_pix = nH*nW.
    """
    B, C, HW = x_flat.shape
    CO = w_stk.shape[0]
    rs = W + 2 * p - 1                 # truncated padded row stride == nW
    nH = H + 2 * p - 1
    n_pix = nH * rs                    # nH * nW
    pf = (H + 2 * p) * rs              # flat length of truncated padded image
    F = _round_up(pf + 1, 128)         # padded-image scratch width (zero tail incl. idx pf)
    NPAD = _round_up(n_pix, 128)       # per-batch 128-aligned lane segment in the stack
    G = _pick_group_size(B)
    num_groups = B // G
    shifts = (0, 1, rs, rs + 1)        # taps (kh,kw) = (0,0),(0,1),(1,0),(1,1)

    def kernel(w_ref, x_ref, o_ref, xpad_ref, xstk_ref):
        # w_ref: (CO, 4C) resident   x_ref: (G, C, HW)   o_ref: (G, CO, n_pix)
        # xpad_ref: (C, F) scratch   xstk_ref: (4C, G*NPAD) scratch
        # Zero pad rows / pad columns / tail once per step; interior is overwritten below.
        xpad_ref[...] = jnp.zeros_like(xpad_ref)
        for g in range(G):
            # Scatter the H raw image rows into the column-truncated padded flat layout.
            for h in range(H):
                d = (h + p) * rs + p
                xpad_ref[:, d:d + W] = x_ref[g, :, h * W:(h + 1) * W]
            # Build the stacked K=64 operand: 4 lane-shifted copies of the padded image.
            c0 = g * NPAD
            for t, s in enumerate(shifts):
                xstk_ref[t * C:(t + 1) * C, c0:c0 + n_pix] = xpad_ref[:, s:s + n_pix]
        # One MXU matmul over all packed batches: (CO, 4C) @ (4C, G*NPAD), f32 accumulate.
        acc = jnp.dot(w_ref[...], xstk_ref[...], preferred_element_type=jnp.float32)
        for g in range(G):
            o_ref[g] = acc[:, g * NPAD:g * NPAD + n_pix].astype(o_ref.dtype)

    return pl.pallas_call(
        kernel,
        out_shape=jax.ShapeDtypeStruct((B, CO, n_pix), out_dtype),
        grid_spec=pltpu.PrefetchScalarGridSpec(
            num_scalar_prefetch=0,
            grid=(num_groups,),
            in_specs=[
                pl.BlockSpec((CO, 4 * C), lambda i: (0, 0)),    # stacked weights, resident
                pl.BlockSpec((G, C, HW), lambda i: (i, 0, 0)),  # raw activations
            ],
            out_specs=pl.BlockSpec((G, CO, n_pix), lambda i: (i, 0, 0)),
            scratch_shapes=[
                pltpu.VMEM((C, F), jnp.float32),                # padded flat image
                pltpu.VMEM((4 * C, G * NPAD), jnp.float32),     # stacked K=64 operand
            ]),
        compiler_params=pltpu.CompilerParams(
            dimension_semantics=("parallel",)),                 # v7x: groups across TCs
    )(w_stk, x_flat)


def kernel_trick_forward(x, param_diff, param_same, padding=1):
    """Forward pass of kernel_trick (default stride=1).

    x: NCHW (B, 16, H, W) float32.  Returns NCHW (B, 16, H+2p-1, W+2p-1).
    """
    # TODO(synk): stride==2 branch (extra nn.Conv2d 3x3/2 downsample) is not
    # instantiated by the default module config (stride=1) and is omitted.
    # TODO(synk): for large H (~>250) add a spatial lane-tiling grid axis and an
    # explicit vmem_limit_bytes (v7x has only 64 MiB VMEM); at H=16 one block per
    # batch-group uses < 0.5 MiB so no tiling is needed.
    B, C, H, W = x.shape
    assert C == 16 and H == W, "module reshape assumes square input, 16 channels"
    p = padding
    assert p >= 1, "flat-shift padding trick requires padding >= 1"
    nH = H + 2 * p - 1

    # Tiny weight construction (a few KB) stays in XLA.
    w_conv = build_weight(param_diff, param_same)                      # (16,16,2,2)
    w_stk = jnp.transpose(w_conv, (0, 2, 3, 1)).reshape(16, 64)        # (co, 16*t + ci)

    # Free reshape: raw image rows, no wrapper padding passes.
    x_flat = x.reshape(B, C, H * W)

    y = _fused_conv_pallas(x_flat, w_stk, H=H, W=W, p=p, out_dtype=x.dtype)

    # Output already in exact NCHW flat order -> free reshape only.
    return y.reshape(B, 16, nH, nH)


if __name__ == "__main__":
    key = jax.random.PRNGKey(0)
    k1, k2, k3 = jax.random.split(key, 3)

    # Parameters (deterministic stand-ins for torch.randn in __init__).
    param_diff = jax.random.normal(k1, (16, 1, 4), dtype=jnp.float32)
    param_same = jax.random.normal(k2, (16, 15, 1), dtype=jnp.float32)

    # Input: NCHW, batch=2, 16 channels (fixed by the module), 16x16 spatial.
    x = jax.random.normal(k3, (2, 16, 16, 16), dtype=jnp.float32)

    out = jax.jit(kernel_trick_forward)(x, param_diff, param_same)
    out = jax.block_until_ready(out)
    assert out.shape == (2, 16, 17, 17), out.shape

    # Pure-JAX reference (same cross-correlation semantics as F.conv2d grouped trick).
    w_conv = build_weight(param_diff, param_same)
    ref = jax.lax.conv_general_dilated(
        x, w_conv, window_strides=(1, 1), padding=((1, 1), (1, 1)),
        dimension_numbers=("NCHW", "OIHW", "NCHW"))
    max_err = float(jnp.max(jnp.abs(out - ref)))
    assert jnp.allclose(out, ref, atol=2e-3, rtol=2e-3), max_err

    print("KERNEL_OK")
</pallas_src>

<mosaic_0001>
module attributes {stable_mosaic.version = 11 : i64} {
  func.func @kernel(%arg0: i32, %arg1: memref<16x64xf32, #tpu.memory_space<vmem>>, %arg2: memref<1x16x256xf32, #tpu.memory_space<vmem>>, %arg3: memref<1x16x289xf32, #tpu.memory_space<vmem>>, %arg4: memref<16x384xf32, #tpu.memory_space<vmem>>, %arg5: memref<64x384xf32, #tpu.memory_space<vmem>>) attributes {dimension_semantics = [#tpu.dimension_semantics<parallel>], iteration_bounds = array<i64: 2>, scalar_prefetch = 0 : i64, scratch_operands = 2 : i64, tpu.core_type = #tpu.core_type<tc>, window_params = [{pipeline_mode = #tpu.pipeline_mode<synchronous>, transform_indices = @transform_0, window_bounds = array<i64: 16, 64>}, {transform_indices = @transform_1, window_bounds = array<i64: 1, 16, 256>}, {transform_indices = @transform_2, window_bounds = array<i64: 1, 16, 289>}]} {
    %cst = arith.constant 0.000000e+00 : f32
    %0 = vector.broadcast %cst : f32 to vector<16x384xf32>
    %c0 = arith.constant 0 : index
    %c0_0 = arith.constant 0 : index
    %1 = vector.load %arg4[%c0, %c0_0] : memref<16x384xf32, #tpu.memory_space<vmem>>, vector<16x384xf32>
    tpu.vector_store %arg4[%c0, %c0_0], %0 {strides = array<i32>} : memref<16x384xf32, #tpu.memory_space<vmem>>, vector<16x384xf32>,
    %c0_1 = arith.constant 0 : index
    %c0_2 = arith.constant 0 : index
    %c0_3 = arith.constant 0 : index
    %2 = vector.load %arg2[%c0_1, %c0_2, %c0_3] : memref<1x16x256xf32, #tpu.memory_space<vmem>>, vector<1x16x16xf32>
    %3 = vector.shape_cast %2 : vector<1x16x16xf32> to vector<16x16xf32>
    %c0_4 = arith.constant 0 : index
    %c18 = arith.constant 18 : index
    %4 = vector.load %arg4[%c0_4, %c18] : memref<16x384xf32, #tpu.memory_space<vmem>>, vector<16x16xf32>
    tpu.vector_store %arg4[%c0_4, %c18], %3 {strides = array<i32>} : memref<16x384xf32, #tpu.memory_space<vmem>>, vector<16x16xf32>,
    %c0_5 = arith.constant 0 : index
    %c0_6 = arith.constant 0 : index
    %c16 = arith.constant 16 : index
    %5 = vector.load %arg2[%c0_5, %c0_6, %c16] : memref<1x16x256xf32, #tpu.memory_space<vmem>>, vector<1x16x16xf32>
    %6 = vector.shape_cast %5 : vector<1x16x16xf32> to vector<16x16xf32>
    %c0_7 = arith.constant 0 : index
    %c35 = arith.constant 35 : index
    %7 = vector.load %arg4[%c0_7, %c35] : memref<16x384xf32, #tpu.memory_space<vmem>>, vector<16x16xf32>
    tpu.vector_store %arg4[%c0_7, %c35], %6 {strides = array<i32>} : memref<16x384xf32, #tpu.memory_space<vmem>>, vector<16x16xf32>,
    %c0_8 = arith.constant 0 : index
    %c0_9 = arith.constant 0 : index
    %c32 = arith.constant 32 : index
    %8 = vector.load %arg2[%c0_8, %c0_9, %c32] : memref<1x16x256xf32, #tpu.memory_space<vmem>>, vector<1x16x16xf32>
    %9 = vector.shape_cast %8 : vector<1x16x16xf32> to vector<16x16xf32>
    %c0_10 = arith.constant 0 : index
    %c52 = arith.constant 52 : index
    %10 = vector.load %arg4[%c0_10, %c52] : memref<16x384xf32, #tpu.memory_space<vmem>>, vector<16x16xf32>
    tpu.vector_store %arg4[%c0_10, %c52], %9 {strides = array<i32>} : memref<16x384xf32, #tpu.memory_space<vmem>>, vector<16x16xf32>,
    %c0_11 = arith.constant 0 : index
    %c0_12 = arith.constant 0 : index
    %c48 = arith.constant 48 : index
    %11 = vector.load %arg2[%c0_11, %c0_12, %c48] : memref<1x16x256xf32, #tpu.memory_space<vmem>>, vector<1x16x16xf32>
    %12 = vector.shape_cast %11 : vector<1x16x16xf32> to vector<16x16xf32>
    %c0_13 = arith.constant 0 : index
    %c69 = arith.constant 69 : index
    %13 = vector.load %arg4[%c0_13, %c69] : memref<16x384xf32, #tpu.memory_space<vmem>>, vector<16x16xf32>
    tpu.vector_store %arg4[%c0_13, %c69], %12 {strides = array<i32>} : memref<16x384xf32, #tpu.memory_space<vmem>>, vector<16x16xf32>,
    %c0_14 = arith.constant 0 : index
    %c0_15 = arith.constant 0 : index
    %c64 = arith.constant 64 : index
    %14 = vector.load %arg2[%c0_14, %c0_15, %c64] : memref<1x16x256xf32, #tpu.memory_space<vmem>>, vector<1x16x16xf32>
    %15 = vector.shape_cast %14 : vector<1x16x16xf32> to vector<16x16xf32>
    %c0_16 = arith.constant 0 : index
    %c86 = arith.constant 86 : index
    %16 = vector.load %arg4[%c0_16, %c86] : memref<16x384xf32, #tpu.memory_space<vmem>>, vector<16x16xf32>
    tpu.vector_store %arg4[%c0_16, %c86], %15 {strides = array<i32>} : memref<16x384xf32, #tpu.memory_space<vmem>>, vector<16x16xf32>,
    %c0_17 = arith.constant 0 : index
    %c0_18 = arith.constant 0 : index
    %c80 = arith.constant 80 : index
    %17 = vector.load %arg2[%c0_17, %c0_18, %c80] : memref<1x16x256xf32, #tpu.memory_space<vmem>>, vector<1x16x16xf32>
    %18 = vector.shape_cast %17 : vector<1x16x16xf32> to vector<16x16xf32>
    %c0_19 = arith.constant 0 : index
    %c103 = arith.constant 103 : index
    %19 = vector.load %arg4[%c0_19, %c103] : memref<16x384xf32, #tpu.memory_space<vmem>>, vector<16x16xf32>
    tpu.vector_store %arg4[%c0_19, %c103], %18 {strides = array<i32>} : memref<16x384xf32, #tpu.memory_space<vmem>>, vector<16x16xf32>,
    %c0_20 = arith.constant 0 : index
    %c0_21 = arith.constant 0 : index
    %c96 = arith.constant 96 : index
    %20 = vector.load %arg2[%c0_20, %c0_21, %c96] : memref<1x16x256xf32, #tpu.memory_space<vmem>>, vector<1x16x16xf32>
    %21 = vector.shape_cast %20 : vector<1x16x16xf32> to vector<16x16xf32>
    %c0_22 = arith.constant 0 : index
    %c120 = arith.constant 120 : index
    %22 = vector.load %arg4[%c0_22, %c120] : memref<16x384xf32, #tpu.memory_space<vmem>>, vector<16x16xf32>
    tpu.vector_store %arg4[%c0_22, %c120], %21 {strides = array<i32>} : memref<16x384xf32, #tpu.memory_space<vmem>>, vector<16x16xf32>,
    %c0_23 = arith.constant 0 : index
    %c0_24 = arith.constant 0 : index
    %c112 = arith.constant 112 : index
    %23 = vector.load %arg2[%c0_23, %c0_24, %c112] : memref<1x16x256xf32, #tpu.memory_space<vmem>>, vector<1x16x16xf32>
    %24 = vector.shape_cast %23 : vector<1x16x16xf32> to vector<16x16xf32>
    %c0_25 = arith.constant 0 : index
    %c137 = arith.constant 137 : index
    %25 = vector.load %arg4[%c0_25, %c137] : memref<16x384xf32, #tpu.memory_space<vmem>>, vector<16x16xf32>
    tpu.vector_store %arg4[%c0_25, %c137], %24 {strides = array<i32>} : memref<16x384xf32, #tpu.memory_space<vmem>>, vector<16x16xf32>,
    %c0_26 = arith.constant 0 : index
    %c0_27 = arith.constant 0 : index
    %c128 = arith.constant 128 : index
    %26 = vector.load %arg2[%c0_26, %c0_27, %c128] : memref<1x16x256xf32, #tpu.memory_space<vmem>>, vector<1x16x16xf32>
    %27 = vector.shape_cast %26 : vector<1x16x16xf32> to vector<16x16xf32>
    %c0_28 = arith.constant 0 : index
    %c154 = arith.constant 154 : index
    %28 = vector.load %arg4[%c0_28, %c154] : memref<16x384xf32, #tpu.memory_space<vmem>>, vector<16x16xf32>
    tpu.vector_store %arg4[%c0_28, %c154], %27 {strides = array<i32>} : memref<16x384xf32, #tpu.memory_space<vmem>>, vector<16x16xf32>,
    %c0_29 = arith.constant 0 : index
    %c0_30 = arith.constant 0 : index
    %c144 = arith.constant 144 : index
    %29 = vector.load %arg2[%c0_29, %c0_30, %c144] : memref<1x16x256xf32, #tpu.memory_space<vmem>>, vector<1x16x16xf32>
    %30 = vector.shape_cast %29 : vector<1x16x16xf32> to vector<16x16xf32>
    %c0_31 = arith.constant 0 : index
    %c171 = arith.constant 171 : index
    %31 = vector.load %arg4[%c0_31, %c171] : memref<16x384xf32, #tpu.memory_space<vmem>>, vector<16x16xf32>
    tpu.vector_store %arg4[%c0_31, %c171], %30 {strides = array<i32>} : memref<16x384xf32, #tpu.memory_space<vmem>>, vector<16x16xf32>,
    %c0_32 = arith.constant 0 : index
    %c0_33 = arith.constant 0 : index
    %c160 = arith.constant 160 : index
    %32 = vector.load %arg2[%c0_32, %c0_33, %c160] : memref<1x16x256xf32, #tpu.memory_space<vmem>>, vector<1x16x16xf32>
    %33 = vector.shape_cast %32 : vector<1x16x16xf32> to vector<16x16xf32>
    %c0_34 = arith.constant 0 : index
    %c188 = arith.constant 188 : index
    %34 = vector.load %arg4[%c0_34, %c188] : memref<16x384xf32, #tpu.memory_space<vmem>>, vector<16x16xf32>
    tpu.vector_store %arg4[%c0_34, %c188], %33 {strides = array<i32>} : memref<16x384xf32, #tpu.memory_space<vmem>>, vector<16x16xf32>,
    %c0_35 = arith.constant 0 : index
    %c0_36 = arith.constant 0 : index
    %c176 = arith.constant 176 : index
    %35 = vector.load %arg2[%c0_35, %c0_36, %c176] : memref<1x16x256xf32, #tpu.memory_space<vmem>>, vector<1x16x16xf32>
    %36 = vector.shape_cast %35 : vector<1x16x16xf32> to vector<16x16xf32>
    %c0_37 = arith.constant 0 : index
    %c205 = arith.constant 205 : index
    %37 = vector.load %arg4[%c0_37, %c205] : memref<16x384xf32, #tpu.memory_space<vmem>>, vector<16x16xf32>
    tpu.vector_store %arg4[%c0_37, %c205], %36 {strides = array<i32>} : memref<16x384xf32, #tpu.memory_space<vmem>>, vector<16x16xf32>,
    %c0_38 = arith.constant 0 : index
    %c0_39 = arith.constant 0 : index
    %c192 = arith.constant 192 : index
    %38 = vector.load %arg2[%c0_38, %c0_39, %c192] : memref<1x16x256xf32, #tpu.memory_space<vmem>>, vector<1x16x16xf32>
    %39 = vector.shape_cast %38 : vector<1x16x16xf32> to vector<16x16xf32>
    %c0_40 = arith.constant 0 : index
    %c222 = arith.constant 222 : index
    %40 = vector.load %arg4[%c0_40, %c222] : memref<16x384xf32, #tpu.memory_space<vmem>>, vector<16x16xf32>
    tpu.vector_store %arg4[%c0_40, %c222], %39 {strides = array<i32>} : memref<16x384xf32, #tpu.memory_space<vmem>>, vector<16x16xf32>,
    %c0_41 = arith.constant 0 : index
    %c0_42 = arith.constant 0 : index
    %c208 = arith.constant 208 : index
    %41 = vector.load %arg2[%c0_41, %c0_42, %c208] : memref<1x16x256xf32, #tpu.memory_space<vmem>>, vector<1x16x16xf32>
    %42 = vector.shape_cast %41 : vector<1x16x16xf32> to vector<16x16xf32>
    %c0_43 = arith.constant 0 : index
    %c239 = arith.constant 239 : index
    %43 = vector.load %arg4[%c0_43, %c239] : memref<16x384xf32, #tpu.memory_space<vmem>>, vector<16x16xf32>
    tpu.vector_store %arg4[%c0_43, %c239], %42 {strides = array<i32>} : memref<16x384xf32, #tpu.memory_space<vmem>>, vector<16x16xf32>,
    %c0_44 = arith.constant 0 : index
    %c0_45 = arith.constant 0 : index
    %c224 = arith.constant 224 : index
    %44 = vector.load %arg2[%c0_44, %c0_45, %c224] : memref<1x16x256xf32, #tpu.memory_space<vmem>>, vector<1x16x16xf32>
    %45 = vector.shape_cast %44 : vector<1x16x16xf32> to vector<16x16xf32>
    %c0_46 = arith.constant 0 : index
    %c256 = arith.constant 256 : index
    %46 = vector.load %arg4[%c0_46, %c256] : memref<16x384xf32, #tpu.memory_space<vmem>>, vector<16x16xf32>
    tpu.vector_store %arg4[%c0_46, %c256], %45 {strides = array<i32>} : memref<16x384xf32, #tpu.memory_space<vmem>>, vector<16x16xf32>,
    %c0_47 = arith.constant 0 : index
    %c0_48 = arith.constant 0 : index
    %c240 = arith.constant 240 : index
    %47 = vector.load %arg2[%c0_47, %c0_48, %c240] : memref<1x16x256xf32, #tpu.memory_space<vmem>>, vector<1x16x16xf32>
    %48 = vector.shape_cast %47 : vector<1x16x16xf32> to vector<16x16xf32>
    %c0_49 = arith.constant 0 : index
    %c273 = arith.constant 273 : index
    %49 = vector.load %arg4[%c0_49, %c273] : memref<16x384xf32, #tpu.memory_space<vmem>>, vector<16x16xf32>
    tpu.vector_store %arg4[%c0_49, %c273], %48 {strides = array<i32>} : memref<16x384xf32, #tpu.memory_space<vmem>>, vector<16x16xf32>,
    %c0_50 = arith.constant 0 : index
    %c0_51 = arith.constant 0 : index
    %50 = vector.load %arg4[%c0_50, %c0_51] : memref<16x384xf32, #tpu.memory_space<vmem>>, vector<16x289xf32>
    %c0_52 = arith.constant 0 : index
    %c0_53 = arith.constant 0 : index
    %51 = vector.load %arg5[%c0_52, %c0_53] : memref<64x384xf32, #tpu.memory_space<vmem>>, vector<16x289xf32>
    tpu.vector_store %arg5[%c0_52, %c0_53], %50 {strides = array<i32>} : memref<64x384xf32, #tpu.memory_space<vmem>>, vector<16x289xf32>,
    %c0_54 = arith.constant 0 : index
    %c1 = arith.constant 1 : index
    %52 = vector.load %arg4[%c0_54, %c1] : memref<16x384xf32, #tpu.memory_space<vmem>>, vector<16x289xf32>
    %c16_55 = arith.constant 16 : index
    %c0_56 = arith.constant 0 : index
    %53 = vector.load %arg5[%c16_55, %c0_56] : memref<64x384xf32, #tpu.memory_space<vmem>>, vector<16x289xf32>
    tpu.vector_store %arg5[%c16_55, %c0_56], %52 {strides = array<i32>} : memref<64x384xf32, #tpu.memory_space<vmem>>, vector<16x289xf32>,
    %c0_57 = arith.constant 0 : index
    %c17 = arith.constant 17 : index
    %54 = vector.load %arg4[%c0_57, %c17] : memref<16x384xf32, #tpu.memory_space<vmem>>, vector<16x289xf32>
    %c32_58 = arith.constant 32 : index
    %c0_59 = arith.constant 0 : index
    %55 = vector.load %arg5[%c32_58, %c0_59] : memref<64x384xf32, #tpu.memory_space<vmem>>, vector<16x289xf32>
    tpu.vector_store %arg5[%c32_58, %c0_59], %54 {strides = array<i32>} : memref<64x384xf32, #tpu.memory_space<vmem>>, vector<16x289xf32>,
    %c0_60 = arith.constant 0 : index
    %c18_61 = arith.constant 18 : index
    %56 = vector.load %arg4[%c0_60, %c18_61] : memref<16x384xf32, #tpu.memory_space<vmem>>, vector<16x289xf32>
    %c48_62 = arith.constant 48 : index
    %c0_63 = arith.constant 0 : index
    %57 = vector.load %arg5[%c48_62, %c0_63] : memref<64x384xf32, #tpu.memory_space<vmem>>, vector<16x289xf32>
    tpu.vector_store %arg5[%c48_62, %c0_63], %56 {strides = array<i32>} : memref<64x384xf32, #tpu.memory_space<vmem>>, vector<16x289xf32>,
    %c0_64 = arith.constant 0 : index
    %c0_65 = arith.constant 0 : index
    %58 = vector.load %arg1[%c0_64, %c0_65] : memref<16x64xf32, #tpu.memory_space<vmem>>, vector<16x64xf32>
    %c0_66 = arith.constant 0 : index
    %c0_67 = arith.constant 0 : index
    %59 = vector.load %arg5[%c0_66, %c0_67] : memref<64x384xf32, #tpu.memory_space<vmem>>, vector<64x384xf32>
    %cst_68 = arith.constant dense<0.000000e+00> : vector<16x384xf32>
    %60 = tpu.matmul %58, %59, %cst_68 {dimension_numbers = #tpu.dot_dimension_numbers<[1], [0], [0], [1], [0, 0, 1, 1], [], []>} : vector<16x64xf32>, vector<64x384xf32>, vector<16x384xf32> -> vector<16x384xf32>
    %61 = vector.extract_strided_slice %60 {offsets = [0, 0], sizes = [16, 289], strides = [1, 1]} : vector<16x384xf32> to vector<16x289xf32>
    %c0_69 = arith.constant 0 : index
    %c0_70 = arith.constant 0 : index
    %c0_71 = arith.constant 0 : index
    %62 = vector.load %arg3[%c0_69, %c0_70, %c0_71] : memref<1x16x289xf32, #tpu.memory_space<vmem>>, vector<1x16x289xf32>
    %63 = vector.shape_cast %62 : vector<1x16x289xf32> to vector<16x289xf32>
    %64 = vector.shape_cast %61 : vector<16x289xf32> to vector<1x16x289xf32>
    tpu.vector_store %arg3[%c0_69, %c0_70, %c0_71], %64 {strides = array<i32>} : memref<1x16x289xf32, #tpu.memory_space<vmem>>, vector<1x16x289xf32>,
    return
  }
  func.func @transform_0(%arg0: i32) -> (i32, i32) {
    %c0_i32 = arith.constant 0 : i32
    %c0_i32_0 = arith.constant 0 : i32
    %c0_i32_1 = arith.constant 0 : i32
    return %c0_i32, %c0_i32_0 : i32, i32
  }
  func.func @transform_1(%arg0: i32) -> (i32, i32, i32) {
    %c0_i32 = arith.constant 0 : i32
    %c0_i32_0 = arith.constant 0 : i32
    %c0_i32_1 = arith.constant 0 : i32
    return %arg0, %c0_i32, %c0_i32_0 : i32, i32, i32
  }
  func.func @transform_2(%arg0: i32) -> (i32, i32, i32) {
    %c0_i32 = arith.constant 0 : i32
    %c0_i32_0 = arith.constant 0 : i32
    %c0_i32_1 = arith.constant 0 : i32
    return %arg0, %c0_i32, %c0_i32_0 : i32, i32, i32
  }
}

</mosaic_0001>

<llo_original>
// kernel: kernel_trick_forward.1
$region0: #{kernel_trick_forward.1}
  #allocation0 [shape = 'u32[]', space=smem, size = 0x4, offset = 0x4, fixed_abs, tag = 'smem constant byte address 0x4 - core index']
  #allocation1 [shape = 'u32[144,128]{1,0:T(1,128)}', space=vmem, size = 0x12000, scoped, tag = 'internal scratch']
  #allocation2 [shape = 'f32[16,384]{1,0:T(8,128)}', space=vmem, size = 0x6000, scoped, tag = 'scratch operand']
  #allocation3 [shape = 'f32[64,384]{1,0:T(8,128)}', space=vmem, size = 0x18000, scoped, tag = 'scratch operand']
  %s0 = inlined_call_operand.vmem [shape: f32[16,64], index: 0, kind: input, shape index: {}]
  %s1 = inlined_call_operand.vmem [shape: f32[2,16,256], index: 1, kind: input, shape index: {}]
  %s2 = inlined_call_operand.vmem [shape: f32[2,16,289], index: 2, kind: output, shape index: {}]
  %s3 = sld [smem:[#allocation0]]
  $region41: #{kernel_trick_forward.1} parent=0
    _
  %s5 = ssub.s32 1, %s3
  %s6 = scalar_select 0, %s5, %s3
  loop: start=0, step=1, limit=4
  $region2: #{kernel_trick_forward.1} parent=0 // loop_pre_header
    _
  $region3: #{kernel_trick_forward.1} parent=0 // loop_header
    %s8 = sphi 0, %s12
    %p9 = scmp.ge.s32.totalorder %s8, 4
    %s16 = sphi 0, %s16
    %s18 = sphi 0, %s16
    %s19 = sphi 0, %s18
    %s33 = sphi 0, %s19
    %s39 = sphi 0, %s41
    %s42 = sphi 0, %s39
    %s43 = sphi 0, %s42
    %s59 = sphi 0, %s43
    %s65 = sphi 0, %s67
    %s68 = sphi 0, %s65
    %s69 = sphi 0, %s68
    %s85 = sphi 0, %s69
  $region4: #{kernel_trick_forward.1} parent=0 // loop_header_branch
    %11 = sbr.rel (%p9) target = $region8
  $region5: #{kernel_trick_forward.1} parent=0 // loop_body
    %s13 = ssub.s32 %s8, 1
    %s14 = ssub.s32 %s8, 2
    %s15 = sadd.s32 %s8, 1
    %s17 = sadd.s32 %s16, 1
    %p20 = scmp.eq.s32.totalorder %s8, 1
    %p21 = scmp.ne.s32.totalorder %s16, %s18
    %p22 = scmp.eq.s32.totalorder %s8, 0
    %p23 = por %p21, %p22
    %p24 = scmp.ne.s32.totalorder %s16, %s18
    %p25 = scmp.eq.s32.totalorder %s13, 1
    %p26 = por %p24, %p25
    %p27 = scmp.ne.s32.totalorder %s18, %s19
    %p28 = scmp.eq.s32.totalorder %s13, 0
    %p29 = por %p27, %p28
    %p30 = scmp.ne.s32.totalorder %s18, %s19
    %p31 = scmp.eq.s32.totalorder %s14, 1
    %p32 = por %p30, %p31
    %p34 = scmp.ne.s32.totalorder %s19, %s33
    %p35 = scmp.eq.s32.totalorder %s14, 0
    %p36 = por %p34, %p35
    %s37 = ssub.s32 %s8, %s15
    %p38 = scmp.eq.s32.totalorder %s37, 0
    %s40 = sadd.s32 %s39, 1
    %s41 = scalar_select %p38, %s39, %s40
    %p44 = pneg %p38
    %p45 = scmp.eq.s32.totalorder %s8, 1
    %p46 = por %p44, %p45
    %p47 = scmp.ne.s32.totalorder %s39, %s42
    %p48 = scmp.eq.s32.totalorder %s8, 0
    %p49 = por %p47, %p48
    %p50 = scmp.ne.s32.totalorder %s39, %s42
    %p51 = scmp.eq.s32.totalorder %s13, 1
    %p52 = por %p50, %p51
    %p53 = scmp.ne.s32.totalorder %s42, %s43
    %p54 = scmp.eq.s32.totalorder %s13, 0
    %p55 = por %p53, %p54
    %p56 = scmp.ne.s32.totalorder %s42, %s43
    %p57 = scmp.eq.s32.totalorder %s14, 1
    %p58 = por %p56, %p57
    %p60 = scmp.ne.s32.totalorder %s43, %s59
    %p61 = scmp.eq.s32.totalorder %s14, 0
    %p62 = por %p60, %p61
    %s63 = ssub.s32 %s8, %s15
    %p64 = scmp.eq.s32.totalorder %s63, 0
    %s66 = sadd.s32 %s65, 1
    %s67 = scalar_select %p64, %s65, %s66
    %p70 = pneg %p64
    %p71 = scmp.eq.s32.totalorder %s8, 1
    %p72 = por %p70, %p71
    %p73 = scmp.ne.s32.totalorder %s65, %s68
    %p74 = scmp.eq.s32.totalorder %s8, 0
    %p75 = por %p73, %p74
    %p76 = scmp.ne.s32.totalorder %s65, %s68
    %p77 = scmp.eq.s32.totalorder %s13, 1
    %p78 = por %p76, %p77
    %p79 = scmp.ne.s32.totalorder %s68, %s69
    %p80 = scmp.eq.s32.totalorder %s13, 0
    %p81 = por %p79, %p80
    %p82 = scmp.ne.s32.totalorder %s68, %s69
    %p83 = scmp.eq.s32.totalorder %s14, 1
    %p84 = por %p82, %p83
    %p86 = scmp.ne.s32.totalorder %s69, %s85
    %p87 = scmp.eq.s32.totalorder %s14, 0
    %p88 = por %p86, %p87
    %p89 = scmp.le.s32.totalorder 1, %s8
    %p90 = scmp.lt.s32.totalorder %s8, 3
    %p91 = pnand %p89, %p90
    %p92 = pneg %p91
    // Predicated region
    $region9: #{kernel_trick_forward.1} parent=5 // pred_check
      _
    $region10: #{kernel_trick_forward.1} parent=5 // pred_check_branch
      %94 = sbr.rel (%p91) target = $region12
    $region11: #{kernel_trick_forward.1} parent=5 // pred_region
      %s95 = ssub.s32 %s8, 1
      // Predicated region
      $region13: #{kernel_trick_forward.1} parent=11 // pred_check
        %p96 = pneg %p29
      $region14: #{kernel_trick_forward.1} parent=11 // pred_check_branch
        %98 = sbr.rel (%p96) target = $region16
      $region15: #{kernel_trick_forward.1} parent=11 // pred_region
        _
      $region16: #{kernel_trick_forward.1} parent=11 // pred_fallthru
        _
    $region12: #{kernel_trick_forward.1} parent=5 // pred_fallthru
      _
    %p99 = scmp.lt.s32.totalorder %s8, 2
    // Predicated region
    $region17: #{kernel_trick_forward.1} parent=5 // pred_check
      %p100 = pneg %p99
    $region18: #{kernel_trick_forward.1} parent=5 // pred_check_branch
      %102 = sbr.rel (%p100) target = $region20
    $region19: #{kernel_trick_forward.1} parent=5 // pred_region
      // Predicated region
      $region21: #{kernel_trick_forward.1} parent=19 // pred_check
        %p103 = pneg %p49
      $region22: #{kernel_trick_forward.1} parent=19 // pred_check_branch
        %105 = sbr.rel (%p103) target = $region24
      $region23: #{kernel_trick_forward.1} parent=19 // pred_region
        %p106 = scmp.lt.s32.totalorder %s8, 1
        %s107 = scalar_select %p106, %s8, 1
        %s108 = smul.addr %s107, 4
        %s109 = smul.addr %s108, 8
        %s110 = scalar_lea.vmem %s1, %s109
      $region24: #{kernel_trick_forward.1} parent=19 // pred_fallthru
        _
    $region20: #{kernel_trick_forward.1} parent=5 // pred_fallthru
      _
    %p111 = scmp.le.s32.totalorder 1, %s8
    %p112 = scmp.lt.s32.totalorder %s8, 3
    %p113 = pnand %p111, %p112
    %p114 = pneg %p113
    // Predicated region
    $region25: #{kernel_trick_forward.1} parent=5 // pred_check
      _
    $region26: #{kernel_trick_forward.1} parent=5 // pred_check_branch
      %116 = sbr.rel (%p113) target = $region28
    $region27: #{kernel_trick_forward.1} parent=5 // pred_region
      %s117 = ssub.s32 %s8, 1
      %p118 = pneg %p29
      %p119 = pneg %p26
      %p120 = scmp.lt.s32.totalorder %s13, 1
      %s121 = scalar_select %p120, %s13, 1
      %s122 = smul.addr %s121, 4
      %s123 = smul.addr %s122, 8
      %s124 = scalar_lea.vmem %s1, %s123
      %p125 = pneg %p55
      %p126 = pneg %p52
      %p127 = pneg %p81
      %p128 = pneg %p78
      %p129 = scmp.lt.s32.totalorder %s13, 1
      %s130 = scalar_select %p129, %s13, 1
      %s131 = smul.addr %s130, 6
      %s132 = smul.addr %s131, 8
      %s133 = scalar_lea.vmem %s2, %s132
      %p134 = scmp.lt.s32.totalorder %s13, 1
      %s135 = scalar_select %p134, %s13, 1
      %s136 = smul.addr %s135, 4
      %s137 = smul.addr %s136, 8
      %s138 = scalar_lea.vmem %s1, %s137
      %p139 = scmp.lt.s32.totalorder %s13, 1
      %s140 = scalar_select %p139, %s13, 1
      %s141 = smul.addr %s140, 6
      %s142 = smul.addr %s141, 8
      %s143 = scalar_lea.vmem %s2, %s142
      %144 = vst [vmem:[#allocation2] sm:$0xff] 0.0
      %145 = vst [vmem:[#allocation2 + $0x8] sm:$0xff] 0.0
      %146 = vst [vmem:[#allocation2 + $0x10] sm:$0xff] 0.0
      %147 = vst [vmem:[#allocation2 + $0x18] sm:$0xff] 0.0
      %148 = vst [vmem:[#allocation2 + $0x20] sm:$0xff] 0.0
      %149 = vst [vmem:[#allocation2 + $0x28] sm:$0xff] 0.0
      %v150 = vld [vmem:[%s138] sm:$0xff]
      %v151 = vld [vmem:[%s138 + $0x10] sm:$0xff]
      %154 = vrot.lane.b32.xlu0 %v150, 18
      %v155 = vpop.permute.xlu0 %154
      %156 = vrot.lane.b32.xlu0 %v151, 18
      %v157 = vpop.permute.xlu0 %156
      %vm160 = vcmask 277648
      %161 = vst.msk [vmem:[#allocation2] sm:$0xff] %vm160, %v155
      %162 = vst.msk [vmem:[#allocation2 + $0x18] sm:$0xff] %vm160, %v157
      %v163 = vld [vmem:[%s138] sm:$0xff]
      %v164 = vld [vmem:[%s138 + $0x10] sm:$0xff]
      %167 = vrot.lane.b32.xlu0 %v163, 19
      %v168 = vpop.permute.xlu0 %167
      %169 = vrot.lane.b32.xlu0 %v164, 19
      %v170 = vpop.permute.xlu0 %169
      %vm173 = vcmask 417048
      %174 = vst.msk [vmem:[#allocation2] sm:$0xff] %vm173, %v168
      %175 = vst.msk [vmem:[#allocation2 + $0x18] sm:$0xff] %vm173, %v170
      %v176 = vld [vmem:[%s138] sm:$0xff]
      %v177 = vld [vmem:[%s138 + $0x10] sm:$0xff]
      %180 = vrot.lane.b32.xlu0 %v176, 20
      %v181 = vpop.permute.xlu0 %180
      %182 = vrot.lane.b32.xlu0 %v177, 20
      %v183 = vpop.permute.xlu0 %182
      %vm186 = vcmask 556448
      %187 = vst.msk [vmem:[#allocation2] sm:$0xff] %vm186, %v181
      %188 = vst.msk [vmem:[#allocation2 + $0x18] sm:$0xff] %vm186, %v183
      %v189 = vld [vmem:[%s138] sm:$0xff]
      %v190 = vld [vmem:[%s138 + $0x10] sm:$0xff]
      %193 = vrot.lane.b32.xlu0 %v189, 21
      %v194 = vpop.permute.xlu0 %193
      %195 = vrot.lane.b32.xlu0 %v190, 21
      %v196 = vpop.permute.xlu0 %195
      %vm199 = vcmask 695848
      %200 = vst.msk [vmem:[#allocation2] sm:$0xff] %vm199, %v194
      %201 = vst.msk [vmem:[#allocation2 + $0x18] sm:$0xff] %vm199, %v196
      %v202 = vld [vmem:[%s138] sm:$0xff]
      %v203 = vld [vmem:[%s138 + $0x10] sm:$0xff]
      %206 = vrot.lane.b32.xlu0 %v202, 22
      %v207 = vpop.permute.xlu0 %206
      %208 = vrot.lane.b32.xlu0 %v203, 22
      %v209 = vpop.permute.xlu0 %208
      %vm212 = vcmask 835248
      %213 = vst.msk [vmem:[#allocation2] sm:$0xff] %vm212, %v207
      %214 = vst.msk [vmem:[#allocation2 + $0x18] sm:$0xff] %vm212, %v209
      %v215 = vld [vmem:[%s138] sm:$0xff]
      %v216 = vld [vmem:[%s138 + $0x10] sm:$0xff]
      %219 = vrot.lane.b32.xlu0 %v215, 23
      %v220 = vpop.permute.xlu0 %219
      %221 = vrot.lane.b32.xlu0 %v216, 23
      %v222 = vpop.permute.xlu0 %221
      %vm225 = vcmask 974648
      %226 = vst.msk [vmem:[#allocation2] sm:$0xff] %vm225, %v220
      %227 = vst.msk [vmem:[#allocation2 + $0x18] sm:$0xff] %vm225, %v222
      %v228 = vld [vmem:[%s138] sm:$0xff]
      %v229 = vld [vmem:[%s138 + $0x10] sm:$0xff]
      %232 = vrot.lane.b32.xlu0 %v228, 24
      %v233 = vpop.permute.xlu0 %232
      %234 = vrot.lane.b32.xlu0 %v229, 24
      %v235 = vpop.permute.xlu0 %234
      %vm238 = vcmask 1048512
      %239 = vst.msk [vmem:[#allocation2] sm:$0xff] %vm238, %v233
      %vm240 = vcmask 64512
      %241 = vst.msk [vmem:[#allocation2 + $0x8] sm:$0xff] %vm240, %v233
      %242 = vst.msk [vmem:[#allocation2 + $0x18] sm:$0xff] %vm238, %v235
      %243 = vst.msk [vmem:[#allocation2 + $0x20] sm:$0xff] %vm240, %v235
      %v244 = vld [vmem:[%s138] sm:$0xff]
      %v245 = vld [vmem:[%s138 + $0x10] sm:$0xff]
      %248 = vrot.lane.b32.xlu0 %v244, 25
      %v249 = vpop.permute.xlu0 %248
      %250 = vrot.lane.b32.xlu0 %v245, 25
      %v251 = vpop.permute.xlu0 %250
      %vm254 = vcmask 203848
      %255 = vst.msk [vmem:[#allocation2 + $0x8] sm:$0xff] %vm254, %v249
      %256 = vst.msk [vmem:[#allocation2 + $0x20] sm:$0xff] %vm254, %v251
      %v257 = vld [vmem:[%s138 + $0x8] sm:$0xff]
      %v258 = vld [vmem:[%s138 + $0x18] sm:$0xff]
      %261 = vrot.lane.b32.xlu0 %v257, 26
      %v262 = vpop.permute.xlu0 %261
      %263 = vrot.lane.b32.xlu0 %v258, 26
      %v264 = vpop.permute.xlu0 %263
      %vm267 = vcmask 343248
      %268 = vst.msk [vmem:[#allocation2 + $0x8] sm:$0xff] %vm267, %v262
      %269 = vst.msk [vmem:[#allocation2 + $0x20] sm:$0xff] %vm267, %v264
      %v270 = vld [vmem:[%s138 + $0x8] sm:$0xff]
      %v271 = vld [vmem:[%s138 + $0x18] sm:$0xff]
      %274 = vrot.lane.b32.xlu0 %v270, 27
      %v275 = vpop.permute.xlu0 %274
      %276 = vrot.lane.b32.xlu0 %v271, 27
      %v277 = vpop.permute.xlu0 %276
      %vm280 = vcmask 482648
      %281 = vst.msk [vmem:[#allocation2 + $0x8] sm:$0xff] %vm280, %v275
      %282 = vst.msk [vmem:[#allocation2 + $0x20] sm:$0xff] %vm280, %v277
      %v283 = vld [vmem:[%s138 + $0x8] sm:$0xff]
      %v284 = vld [vmem:[%s138 + $0x18] sm:$0xff]
      %287 = vrot.lane.b32.xlu0 %v283, 28
      %v288 = vpop.permute.xlu0 %287
      %289 = vrot.lane.b32.xlu0 %v284, 28
      %v290 = vpop.permute.xlu0 %289
      %vm293 = vcmask 622048
      %294 = vst.msk [vmem:[#allocation2 + $0x8] sm:$0xff] %vm293, %v288
      %295 = vst.msk [vmem:[#allocation2 + $0x20] sm:$0xff] %vm293, %v290
      %v296 = vld [vmem:[%s138 + $0x8] sm:$0xff]
      %v297 = vld [vmem:[%s138 + $0x18] sm:$0xff]
      %300 = vrot.lane.b32.xlu0 %v296, 29
      %v301 = vpop.permute.xlu0 %300
      %302 = vrot.lane.b32.xlu0 %v297, 29
      %v303 = vpop.permute.xlu0 %302
      %vm306 = vcmask 761448
      %307 = vst.msk [vmem:[#allocation2 + $0x8] sm:$0xff] %vm306, %v301
      %308 = vst.msk [vmem:[#allocation2 + $0x20] sm:$0xff] %vm306, %v303
      %v309 = vld [vmem:[%s138 + $0x8] sm:$0xff]
      %v310 = vld [vmem:[%s138 + $0x18] sm:$0xff]
      %313 = vrot.lane.b32.xlu0 %v309, 30
      %v314 = vpop.permute.xlu0 %313
      %315 = vrot.lane.b32.xlu0 %v310, 30
      %v316 = vpop.permute.xlu0 %315
      %vm319 = vcmask 900848
      %320 = vst.msk [vmem:[#allocation2 + $0x8] sm:$0xff] %vm319, %v314
      %321 = vst.msk [vmem:[#allocation2 + $0x20] sm:$0xff] %vm319, %v316
      %v322 = vld [vmem:[%s138 + $0x8] sm:$0xff]
      %v323 = vld [vmem:[%s138 + $0x18] sm:$0xff]
      %326 = vrot.lane.b32.xlu0 %v322, 31
      %v327 = vpop.permute.xlu0 %326
      %328 = vrot.lane.b32.xlu0 %v323, 31
      %v329 = vpop.permute.xlu0 %328
      %vm332 = vcmask 1040248
      %333 = vst.msk [vmem:[#allocation2 + $0x8] sm:$0xff] %vm332, %v327
      %334 = vst.msk [vmem:[#allocation2 + $0x20] sm:$0xff] %vm332, %v329
      %v335 = vld [vmem:[%s138 + $0x8] sm:$0xff]
      %v336 = vld [vmem:[%s138 + $0x18] sm:$0xff]
      %339 = vrot.lane.b32.xlu0 %v335, 32
      %v340 = vpop.permute.xlu0 %339
      %341 = vrot.lane.b32.xlu0 %v336, 32
      %v342 = vpop.permute.xlu0 %341
      %vm345 = vcmask 130048
      %346 = vst.msk [vmem:[#allocation2 + $0x10] sm:$0xff] %vm345, %v340
      %347 = vst.msk [vmem:[#allocation2 + $0x28] sm:$0xff] %vm345, %v342
      %v348 = vld [vmem:[%s138 + $0x8] sm:$0xff]
      %v349 = vld [vmem:[%s138 + $0x18] sm:$0xff]
      %352 = vrot.lane.b32.xlu0 %v348, 33
      %v353 = vpop.permute.xlu0 %352
      %354 = vrot.lane.b32.xlu0 %v349, 33
      %v355 = vpop.permute.xlu0 %354
      %vm358 = vcmask 269448
      %359 = vst.msk [vmem:[#allocation2 + $0x10] sm:$0xff] %vm358, %v353
      %360 = vst.msk [vmem:[#allocation2 + $0x28] sm:$0xff] %vm358, %v355
      %v361 = vld [vmem:[#allocation2] sm:$0xff]
      %v362 = vld [vmem:[#allocation2 + $0x8] sm:$0xff]
      %v363 = vld [vmem:[#allocation2 + $0x10] sm:$0xff]
      %v364 = vld [vmem:[#allocation2 + $0x18] sm:$0xff]
      %v365 = vld [vmem:[#allocation2 + $0x20] sm:$0xff]
      %v366 = vld [vmem:[#allocation2 + $0x28] sm:$0xff]
      %367 = vst [vmem:[#allocation3] sm:$0xff] %v361
      %368 = vst [vmem:[#allocation3 + $0x8] sm:$0xff] %v362
      %vm369 = vcmask 269312
      %370 = vst.msk [vmem:[#allocation3 + $0x10] sm:$0xff] %vm369, %v363
      %371 = vst [vmem:[#allocation3 + $0x18] sm:$0xff] %v364
      %372 = vst [vmem:[#allocation3 + $0x20] sm:$0xff] %v365
      %373 = vst.msk [vmem:[#allocation3 + $0x28] sm:$0xff] %vm369, %v366
      %v374 = vld [vmem:[#allocation2] sm:$0xff]
      %v375 = vld [vmem:[#allocation2 + $0x8] sm:$0xff]
      %v376 = vld [vmem:[#allocation2 + $0x10] sm:$0xff]
      %v377 = vld [vmem:[#allocation2 + $0x18] sm:$0xff]
      %v378 = vld [vmem:[#allocation2 + $0x20] sm:$0xff]
      %v379 = vld [vmem:[#allocation2 + $0x28] sm:$0xff]
      %386 = vrot.lane.b32.xlu0 %v374, 127
      %v387 = vpop.permute.xlu0 %386
      %388 = vrot.lane.b32.xlu0 %v375, 127
      %v389 = vpop.permute.xlu0 %388
      %390 = vrot.lane.b32.xlu0 %v376, 127
      %v391 = vpop.permute.xlu0 %390
      %392 = vrot.lane.b32.xlu0 %v377, 127
      %v393 = vpop.permute.xlu0 %392
      %394 = vrot.lane.b32.xlu0 %v378, 127
      %v395 = vpop.permute.xlu0 %394
      %396 = vrot.lane.b32.xlu0 %v379, 127
      %v397 = vpop.permute.xlu0 %396
      %vm398 = vcmask 1039360
      %v399 = vsel %vm398, %v387, %v389
      %v400 = vsel %vm398, %v389, %v391
      %v401 = vsel %vm398, %v393, %v395
      %v402 = vsel %vm398, %v395, %v397
      %409 = vst [vmem:[#allocation3 + $0x30] sm:$0xff] %v399
      %410 = vst [vmem:[#allocation3 + $0x38] sm:$0xff] %v400
      %411 = vst.msk [vmem:[#allocation3 + $0x40] sm:$0xff] %vm369, %v391
      %412 = vst [vmem:[#allocation3 + $0x48] sm:$0xff] %v401
      %413 = vst [vmem:[#allocation3 + $0x50] sm:$0xff] %v402
      %414 = vst.msk [vmem:[#allocation3 + $0x58] sm:$0xff] %vm369, %v397
      %v415 = vld [vmem:[#allocation2] sm:$0xff]
      %v416 = vld [vmem:[#allocation2 + $0x8] sm:$0xff]
      %v417 = vld [vmem:[#allocation2 + $0x10] sm:$0xff]
      %v418 = vld [vmem:[#allocation2 + $0x18] sm:$0xff]
      %v419 = vld [vmem:[#allocation2 + $0x20] sm:$0xff]
      %v420 = vld [vmem:[#allocation2 + $0x28] sm:$0xff]
      %427 = vrot.lane.b32.xlu0 %v415, 111
      %v428 = vpop.permute.xlu0 %427
      %429 = vrot.lane.b32.xlu0 %v416, 111
      %v430 = vpop.permute.xlu0 %429
      %431 = vrot.lane.b32.xlu0 %v417, 111
      %v432 = vpop.permute.xlu0 %431
      %433 = vrot.lane.b32.xlu0 %v418, 111
      %v434 = vpop.permute.xlu0 %433
      %435 = vrot.lane.b32.xlu0 %v419, 111
      %v436 = vpop.permute.xlu0 %435
      %437 = vrot.lane.b32.xlu0 %v420, 111
      %v438 = vpop.permute.xlu0 %437
      %vm439 = vcmask 908288
      %v440 = vsel %vm439, %v428, %v430
      %v441 = vsel %vm439, %v430, %v432
      %v442 = vsel %vm439, %v434, %v436
      %v443 = vsel %vm439, %v436, %v438
      %450 = vst [vmem:[#allocation3 + $0x60] sm:$0xff] %v440
      %451 = vst [vmem:[#allocation3 + $0x68] sm:$0xff] %v441
      %452 = vst.msk [vmem:[#allocation3 + $0x70] sm:$0xff] %vm369, %v432
      %453 = vst [vmem:[#allocation3 + $0x78] sm:$0xff] %v442
      %454 = vst [vmem:[#allocation3 + $0x80] sm:$0xff] %v443
      %455 = vst.msk [vmem:[#allocation3 + $0x88] sm:$0xff] %vm369, %v438
      %v456 = vld [vmem:[#allocation2] sm:$0xff]
      %v457 = vld [vmem:[#allocation2 + $0x8] sm:$0xff]
      %v458 = vld [vmem:[#allocation2 + $0x10] sm:$0xff]
      %v459 = vld [vmem:[#allocation2 + $0x18] sm:$0xff]
      %v460 = vld [vmem:[#allocation2 + $0x20] sm:$0xff]
      %v461 = vld [vmem:[#allocation2 + $0x28] sm:$0xff]
      %468 = vrot.lane.b32.xlu0 %v456, 110
      %v469 = vpop.permute.xlu0 %468
      %470 = vrot.lane.b32.xlu0 %v457, 110
      %v471 = vpop.permute.xlu0 %470
      %472 = vrot.lane.b32.xlu0 %v458, 110
      %v473 = vpop.permute.xlu0 %472
      %474 = vrot.lane.b32.xlu0 %v459, 110
      %v475 = vpop.permute.xlu0 %474
      %476 = vrot.lane.b32.xlu0 %v460, 110
      %v477 = vpop.permute.xlu0 %476
      %478 = vrot.lane.b32.xlu0 %v461, 110
      %v479 = vpop.permute.xlu0 %478
      %vm480 = vcmask 900096
      %v481 = vsel %vm480, %v469, %v471
      %v482 = vsel %vm480, %v471, %v473
      %v483 = vsel %vm480, %v475, %v477
      %v484 = vsel %vm480, %v477, %v479
      %491 = vst [vmem:[#allocation3 + $0x90] sm:$0xff] %v481
      %492 = vst [vmem:[#allocation3 + $0x98] sm:$0xff] %v482
      %493 = vst.msk [vmem:[#allocation3 + $0xa0] sm:$0xff] %vm369, %v473
      %494 = vst [vmem:[#allocation3 + $0xa8] sm:$0xff] %v483
      %495 = vst [vmem:[#allocation3 + $0xb0] sm:$0xff] %v484
      %496 = vst.msk [vmem:[#allocation3 + $0xb8] sm:$0xff] %vm369, %v479
      %v497 = vld [vmem:[%s0] sm:$0xff]
      %v498 = vld [vmem:[%s0 + $0x8] sm:$0xff]
      %v499 = vld [vmem:[#allocation3] sm:$0xff]
      %v500 = vld [vmem:[#allocation3 + $0x8] sm:$0xff]
      %v501 = vld [vmem:[#allocation3 + $0x10] sm:$0xff]
      %v502 = vld [vmem:[#allocation3 + $0x18] sm:$0xff]
      %v503 = vld [vmem:[#allocation3 + $0x20] sm:$0xff]
      %v504 = vld [vmem:[#allocation3 + $0x28] sm:$0xff]
      %v505 = vld [vmem:[#allocation3 + $0x30] sm:$0xff]
      %v506 = vld [vmem:[#allocation3 + $0x38] sm:$0xff]
      %v507 = vld [vmem:[#allocation3 + $0x40] sm:$0xff]
      %v508 = vld [vmem:[#allocation3 + $0x48] sm:$0xff]
      %v509 = vld [vmem:[#allocation3 + $0x50] sm:$0xff]
      %v510 = vld [vmem:[#allocation3 + $0x58] sm:$0xff]
      %v511 = vld [vmem:[#allocation3 + $0x60] sm:$0xff]
      %v512 = vld [vmem:[#allocation3 + $0x68] sm:$0xff]
      %v513 = vld [vmem:[#allocation3 + $0x70] sm:$0xff]
      %v514 = vld [vmem:[#allocation3 + $0x78] sm:$0xff]
      %v515 = vld [vmem:[#allocation3 + $0x80] sm:$0xff]
      %v516 = vld [vmem:[#allocation3 + $0x88] sm:$0xff]
      %v517 = vld [vmem:[#allocation3 + $0x90] sm:$0xff]
      %v518 = vld [vmem:[#allocation3 + $0x98] sm:$0xff]
      %v519 = vld [vmem:[#allocation3 + $0xa0] sm:$0xff]
      %v520 = vld [vmem:[#allocation3 + $0xa8] sm:$0xff]
      %v521 = vld [vmem:[#allocation3 + $0xb0] sm:$0xff]
      %v522 = vld [vmem:[#allocation3 + $0xb8] sm:$0xff]
      %vm523 = vcmask 523264
      %v525 = vsel %vm523, %v497, 0
      %v528 = vsel %vm523, %v498, 0
      %530 = vmatprep.subr.mxu0 0.0
      %531 = vmatpush1.msra.mxu0 0.0
      %532 = vmatprep.subr.mxu0 0.0
      %533 = vmatpush1.msra.mxu0 0.0
      %534 = vmatprep.subr.mxu0 0.0
      %535 = vmatpush1.msra.mxu0 0.0
      %536 = vmatprep.subr.mxu0 0.0
      %537 = vmatpush1.msra.mxu0 0.0
      %538 = vmatprep.subr.mxu0 0.0
      %539 = vmatpush1.msra.mxu0 0.0
      %540 = vmatprep.subr.mxu0 0.0
      %541 = vmatpush1.msra.mxu0 0.0
      %542 = vmatprep.subr.mxu0 0.0
      %543 = vmatpush1.msra.mxu0 0.0
      %544 = vmatprep.subr.mxu0 0.0
      %545 = vmatpush1.msra.mxu0 0.0
      %546 = vmatprep.subr.mxu0 %v521
      %547 = vmatpush1.msra.mxu0 %v520
      %548 = vmatprep.subr.mxu0 %v518
      %549 = vmatpush1.msra.mxu0 %v517
      %550 = vmatprep.subr.mxu0 %v515
      %551 = vmatpush1.msra.mxu0 %v514
      %552 = vmatprep.subr.mxu0 %v512
      %553 = vmatpush1.msra.mxu0 %v511
      %554 = vmatprep.subr.mxu0 %v509
      %555 = vmatpush1.msra.mxu0 %v508
      %556 = vmatprep.subr.mxu0 %v506
      %557 = vmatpush1.msra.mxu0 %v505
      %558 = vmatprep.subr.mxu0 %v503
      %559 = vmatpush1.msra.mxu0 %v502
      %560 = vmatprep.subr.mxu0 %v500
      %561 = vmatpush1.msra.mxu0 %v499
      %562 = vmatprep.subr.mxu0 0.0
      %563 = vmatpush2.msra.mxu0 0.0
      %564 = vmatprep.subr.mxu0 0.0
      %565 = vmatpush2.msra.mxu0 0.0
      %566 = vmatprep.subr.mxu0 0.0
      %567 = vmatpush2.msra.mxu0 0.0
      %568 = vmatprep.subr.mxu0 0.0
      %569 = vmatpush2.msra.mxu0 0.0
      %570 = vmatprep.subr.mxu0 0.0
      %571 = vmatpush2.msra.mxu0 0.0
      %572 = vmatprep.subr.mxu0 0.0
      %573 = vmatpush2.msra.mxu0 0.0
      %574 = vmatprep.subr.mxu0 0.0
      %575 = vmatpush2.msra.mxu0 0.0
      %576 = vmatprep.subr.mxu0 0.0
      %577 = vmatpush2.msra.mxu0 0.0
      %578 = vmatprep.subr.mxu0 0.0
      %579 = vmatpush2.msra.mxu0 0.0
      %580 = vmatprep.subr.mxu0 0.0
      %581 = vmatpush2.msra.mxu0 0.0
      %582 = vmatprep.subr.mxu0 0.0
      %583 = vmatpush2.msra.mxu0 0.0
      %584 = vmatprep.subr.mxu0 0.0
      %585 = vmatpush2.msra.mxu0 0.0
      %586 = vmatprep.subr.mxu0 0.0
      %587 = vmatpush2.msra.mxu0 0.0
      %588 = vmatprep.subr.mxu0 0.0
      %589 = vmatpush2.msra.mxu0 0.0
      %590 = vmatprep.subr.mxu0 0.0
      %591 = vmatpush2.msra.mxu0 0.0
      %592 = vmatprep.subr.mxu0 0.0
      %593 = vmatpush2.msra.mxu0 0.0
      %594 = vmatprep.mubr.f32.mxu0 0.0
      %595 = vmatmul.mubr.f32.gmra.mxu0 %v525
      %v596 = vpop.f32.mrf.mxu0
      %v597 = vadd.f32 0.0, %v596
      %v598 = vpop.f32.mrf.mxu0
      %v599 = vadd.f32 0.0, %v598
      %600 = vmatprep.mubr.f32.mxu0 0.0
      %601 = vmatmul.mubr.f32.gmra.mxu0 %v528
      %v602 = vpop.f32.mrf.mxu0
      %v603 = vadd.f32 0.0, %v602
      %v604 = vpop.f32.mrf.mxu0
      %v605 = vadd.f32 0.0, %v604
      %606 = vdwg.mxu0
      %607 = vmatprep.subr.mxu0 0.0
      %608 = vmatpush1.msra.mxu0 0.0
      %609 = vmatprep.subr.mxu0 0.0
      %610 = vmatpush1.msra.mxu0 0.0
      %611 = vmatprep.subr.mxu0 0.0
      %612 = vmatpush1.msra.mxu0 0.0
      %613 = vmatprep.subr.mxu0 0.0
      %614 = vmatpush1.msra.mxu0 0.0
      %615 = vmatprep.subr.mxu0 0.0
      %616 = vmatpush1.msra.mxu0 0.0
      %617 = vmatprep.subr.mxu0 0.0
      %618 = vmatpush1.msra.mxu0 0.0
      %619 = vmatprep.subr.mxu0 0.0
      %620 = vmatpush1.msra.mxu0 0.0
      %621 = vmatprep.subr.mxu0 0.0
      %622 = vmatpush1.msra.mxu0 0.0
      %623 = vmatprep.subr.mxu0 0.0
      %624 = vmatpush1.msra.mxu0 %v522
      %625 = vmatprep.subr.mxu0 0.0
      %626 = vmatpush1.msra.mxu0 %v519
      %627 = vmatprep.subr.mxu0 0.0
      %628 = vmatpush1.msra.mxu0 %v516
      %629 = vmatprep.subr.mxu0 0.0
      %630 = vmatpush1.msra.mxu0 %v513
      %631 = vmatprep.subr.mxu0 0.0
      %632 = vmatpush1.msra.mxu0 %v510
      %633 = vmatprep.subr.mxu0 0.0
      %634 = vmatpush1.msra.mxu0 %v507
      %635 = vmatprep.subr.mxu0 0.0
      %636 = vmatpush1.msra.mxu0 %v504
      %637 = vmatprep.subr.mxu0 0.0
      %638 = vmatpush1.msra.mxu0 %v501
      %639 = vmatprep.subr.mxu0 0.0
      %640 = vmatpush2.msra.mxu0 0.0
      %641 = vmatprep.subr.mxu0 0.0
      %642 = vmatpush2.msra.mxu0 0.0
      %643 = vmatprep.subr.mxu0 0.0
      %644 = vmatpush2.msra.mxu0 0.0
      %645 = vmatprep.subr.mxu0 0.0
      %646 = vmatpush2.msra.mxu0 0.0
      %647 = vmatprep.subr.mxu0 0.0
      %648 = vmatpush2.msra.mxu0 0.0
      %649 = vmatprep.subr.mxu0 0.0
      %650 = vmatpush2.msra.mxu0 0.0
      %651 = vmatprep.subr.mxu0 0.0
      %652 = vmatpush2.msra.mxu0 0.0
      %653 = vmatprep.subr.mxu0 0.0
      %654 = vmatpush2.msra.mxu0 0.0
      %655 = vmatprep.subr.mxu0 0.0
      %656 = vmatpush2.msra.mxu0 0.0
      %657 = vmatprep.subr.mxu0 0.0
      %658 = vmatpush2.msra.mxu0 0.0
      %659 = vmatprep.subr.mxu0 0.0
      %660 = vmatpush2.msra.mxu0 0.0
      %661 = vmatprep.subr.mxu0 0.0
      %662 = vmatpush2.msra.mxu0 0.0
      %663 = vmatprep.subr.mxu0 0.0
      %664 = vmatpush2.msra.mxu0 0.0
      %665 = vmatprep.subr.mxu0 0.0
      %666 = vmatpush2.msra.mxu0 0.0
      %667 = vmatprep.subr.mxu0 0.0
      %668 = vmatpush2.msra.mxu0 0.0
      %669 = vmatprep.subr.mxu0 0.0
      %670 = vmatpush2.msra.mxu0 0.0
      %671 = vmatprep.mubr.f32.mxu0 0.0
      %672 = vmatmul.mubr.f32.gmra.mxu0 %v525
      %v673 = vpop.f32.mrf.mxu0
      %v674 = vadd.f32 0.0, %v673
      %v675 = vpop.f32.mrf.mxu0
      %676 = vmatprep.mubr.f32.mxu0 0.0
      %677 = vmatmul.mubr.f32.gmra.mxu0 %v528
      %v678 = vpop.f32.mrf.mxu0
      %v679 = vadd.f32 0.0, %v678
      %v680 = vpop.f32.mrf.mxu0
      %681 = vdwg.mxu0
      %682 = vst [vmem:[%s143] sm:$0xff] %v597
      %683 = vst [vmem:[%s143 + $0x8] sm:$0xff] %v599
      %684 = vst.msk [vmem:[%s143 + $0x10] sm:$0xff] %vm369, %v674
      %685 = vst [vmem:[%s143 + $0x18] sm:$0xff] %v603
      %686 = vst [vmem:[%s143 + $0x20] sm:$0xff] %v605
      %687 = vst.msk [vmem:[%s143 + $0x28] sm:$0xff] %vm369, %v679
      %p688 = scmp.lt.s32.totalorder %s13, 1
      %s689 = scalar_select %p688, %s13, 1
      %s690 = smul.addr %s689, 6
      %s691 = smul.addr %s690, 8
      %s692 = scalar_lea.vmem %s2, %s691
      // Predicated region
      $region29: #{kernel_trick_forward.1} parent=27 // pred_check
        %p693 = pneg %p78
      $region30: #{kernel_trick_forward.1} parent=27 // pred_check_branch
        %695 = sbr.rel (%p693) target = $region32
      $region31: #{kernel_trick_forward.1} parent=27 // pred_region
        _
      $region32: #{kernel_trick_forward.1} parent=27 // pred_fallthru
        _
    $region28: #{kernel_trick_forward.1} parent=5 // pred_fallthru
      _
    %p696 = scmp.le.s32.totalorder 2, %s8
    // Predicated region
    $region33: #{kernel_trick_forward.1} parent=5 // pred_check
      %p697 = pneg %p696
    $region34: #{kernel_trick_forward.1} parent=5 // pred_check_branch
      %699 = sbr.rel (%p697) target = $region36
    $region35: #{kernel_trick_forward.1} parent=5 // pred_region
      %s700 = ssub.s32 %s8, 2
      // Predicated region
      $region37: #{kernel_trick_forward.1} parent=35 // pred_check
        %p701 = pneg %p84
      $region38: #{kernel_trick_forward.1} parent=35 // pred_check_branch
        %703 = sbr.rel (%p701) target = $region40
      $region39: #{kernel_trick_forward.1} parent=35 // pred_region
        %p704 = scmp.lt.s32.totalorder %s14, 1
        %s705 = scalar_select %p704, %s14, 1
        %s706 = smul.addr %s705, 6
        %s707 = smul.addr %s706, 8
        %s708 = scalar_lea.vmem %s2, %s707
      $region40: #{kernel_trick_forward.1} parent=35 // pred_fallthru
        _
    $region36: #{kernel_trick_forward.1} parent=5 // pred_fallthru
      _
  $region6: #{kernel_trick_forward.1} parent=0 // loop_footer
    %s12 = sadd.s32 1, %s8
  $region7: #{kernel_trick_forward.1} parent=0 // loop_footer_branch
    %7 = sbr.rel target = $region3
  $region8: #{kernel_trick_forward.1} parent=0 // loop_exit
    _

</llo_original>
